<compile_context>
chip_gen: v7x
topology: tpu7x:2x2x1
jax: 0.10.0
libtpu: 0.0.40
codegen_flags: <defaults>
</compile_context>

<pallas_src>
import functools

import jax
import jax.numpy as jnp
from jax.experimental import pallas as pl
from jax.experimental.pallas import tpu as pltpu


# --------------------------------- kernel -----------------------------------

def _double_qnet_kernel(n_layers, x_ref, *refs):
    """Fused DoubleQNet forward. One grid point = (head block h, batch tile i).

    refs = (W_0, ..., W_{L-1}, b_0, ..., b_{L-1}, out)
      W_l : (1, d_out, d_in)   transposed weight block for this head block
      b_l : (1, d_out, 1)      bias column (broadcast over the lane/batch axis)
      out : (1, d_out_final, TB)   batch tile on the lane axis (lane-dense)
    """
    out_ref = refs[-1]
    w_refs = refs[:n_layers]
    b_refs = refs[n_layers:2 * n_layers]

    # Layer 0: contract the x tile's feature (lane) axis directly, producing
    # a batch-on-lanes activation of shape (d_out, TB). No explicit transpose
    # of x is materialized.
    h = jax.lax.dot_general(
        w_refs[0][0], x_ref[...],
        dimension_numbers=(((1,), (1,)), ((), ())),
        preferred_element_type=jnp.float32) + b_refs[0][0]
    h = jnp.tanh(h)

    # Hidden trunk, statically unrolled (keeps MXU / EUP overlap visible).
    for l in range(1, n_layers - 1):
        h = jnp.tanh(
            jnp.dot(w_refs[l][0], h, preferred_element_type=jnp.float32)
            + b_refs[l][0])

    # Final linear: the dueling a/v combination is already folded into the
    # weights at pack time, so this IS the Q-value. Lane-dense store.
    out_ref[0] = (
        jnp.dot(w_refs[n_layers - 1][0], h, preferred_element_type=jnp.float32)
        + b_refs[n_layers - 1][0]).astype(out_ref.dtype)


# --------------------------- host-side param prep ---------------------------

def _fold_dueling(params):
    """[W1,b1,...,W_nh,b_nh,Wa,ba,Wv,bv] -> [(Wt, bt)] per layer.

    Weights are transposed to (d_out, d_in), biases to (d_out, 1), and the
    dueling combination  v + a - mean(a)  is folded into the final layer:
        W' = Wa + Wv - colmean(Wa),   b' = ba + bv - mean(ba)
    (algebraically exact).
    """
    n_hidden = (len(params) - 4) // 2
    layers = []
    for i in range(n_hidden):
        w, b = params[2 * i], params[2 * i + 1]
        layers.append((w.T, b.T))
    wa, ba, wv, bv = params[-4], params[-3], params[-2], params[-1]
    w_out = wa + wv - jnp.mean(wa, axis=1, keepdims=True)      # (H, A)
    b_out = ba + bv - jnp.mean(ba, axis=1, keepdims=True)      # (1, A)
    layers.append((w_out.T, b_out.T))
    return layers


def _block_diag(a, b):
    out = jnp.zeros((a.shape[0] + b.shape[0], a.shape[1] + b.shape[1]), a.dtype)
    out = out.at[:a.shape[0], :a.shape[1]].set(a)
    out = out.at[a.shape[0]:, a.shape[1]:].set(b)
    return out


def pack_double_qnet_params(q1_params, q2_params, fold_heads=None):
    """One-time packing of both DualQNet heads.

    Returns (weights, biases), each a list with one (n_blocks, d_out, d_in) /
    (n_blocks, d_out, 1) array per layer:
      * fold_heads=True  -> n_blocks = 1, the two heads are fused into a single
        network (first layer row-concat, deeper layers block-diagonal); the
        final layer produces 2*A outputs (q1 rows then q2 rows).
      * fold_heads=False -> n_blocks = 2, heads kept separate (grid axis picks
        the head). Used when 2*n_unit exceeds one MXU pass (> 256).
    """
    l1 = _fold_dueling(q1_params)
    l2 = _fold_dueling(q2_params)
    n_unit = q1_params[0].shape[1]
    if fold_heads is None:
        fold_heads = (2 * n_unit) <= 256

    weights, biases = [], []
    if fold_heads:
        for l, ((w1, b1), (w2, b2)) in enumerate(zip(l1, l2)):
            if l == 0:
                w = jnp.concatenate([w1, w2], axis=0)       # (2H, in_dim)
            else:
                w = _block_diag(w1, w2)                      # (2*do, 2*di)
            b = jnp.concatenate([b1, b2], axis=0)            # (2*do, 1)
            weights.append(w[None])
            biases.append(b[None])
    else:
        for (w1, b1), (w2, b2) in zip(l1, l2):
            weights.append(jnp.stack([w1, w2], axis=0))
            biases.append(jnp.stack([b1, b2], axis=0))
    return weights, biases


# -------------------------------- forward -----------------------------------

def double_qnet_forward(x, packed, n_actions, *, block_batch=1024):
    """DoubleQNet.forward (discrete action case): returns (q1(x), q2(x))."""
    weights, biases = packed
    n_layers = len(weights)
    n_heads = weights[0].shape[0]          # 1 = heads folded, 2 = stacked
    out_dim = weights[-1].shape[1]         # 2*A (folded) or A (stacked)
    batch, in_dim = x.shape

    # Batch tile: full batch when small, else a multiple of 128 (batch lives
    # on the lane axis of every intermediate and of the output).
    if batch <= block_batch:
        tb = batch
    else:
        tb = max(128, (block_batch // 128) * 128)

    kernel = functools.partial(_double_qnet_kernel, n_layers)

    in_specs = [pl.BlockSpec((tb, in_dim), lambda h, i: (i, 0))]
    for w in weights:
        in_specs.append(pl.BlockSpec((1,) + w.shape[1:], lambda h, i: (h, 0, 0)))
    for b in biases:
        in_specs.append(pl.BlockSpec((1,) + b.shape[1:], lambda h, i: (h, 0, 0)))

    out = pl.pallas_call(
        kernel,
        out_shape=jax.ShapeDtypeStruct((n_heads, out_dim, batch), jnp.float32),
        grid=(n_heads, pl.cdiv(batch, tb)),
        in_specs=in_specs,
        out_specs=pl.BlockSpec((1, out_dim, tb), lambda h, i: (h, 0, i)),
        compiler_params=pltpu.CompilerParams(
            dimension_semantics=("parallel", "parallel")),
    )(x, *weights, *biases)

    if n_heads == 1:
        q12 = out[0]                                  # (2A, batch)
        return q12[:n_actions].T, q12[n_actions:].T   # tiny host transposes
    return out[0].T, out[1].T


# ----------------------------- parameter setup ------------------------------

def _init_linear(key, fan_in, fan_out):
    """Deterministic PyTorch-style U(-1/sqrt(fan_in), 1/sqrt(fan_in)) init."""
    kw, kb = jax.random.split(key)
    bound = 1.0 / float(fan_in) ** 0.5
    w = jax.random.uniform(kw, (fan_in, fan_out), jnp.float32, -bound, bound)
    b = jax.random.uniform(kb, (1, fan_out), jnp.float32, -bound, bound)
    return w, b


def init_dual_qnet(key, inputs_dim, outputs_dim, n_layer, n_unit):
    """params = [W1, b1, ..., W_{n_layer-1}, b_{n_layer-1}, Wa, ba, Wv, bv]."""
    n_hidden = n_layer - 1
    keys = jax.random.split(key, n_hidden + 2)
    dims = [inputs_dim] + [n_unit] * n_hidden
    params = []
    for i in range(n_hidden):
        w, b = _init_linear(keys[i], dims[i], dims[i + 1])
        params += [w, b]
    wa, ba = _init_linear(keys[-2], n_unit, outputs_dim)   # a_head
    wv, bv = _init_linear(keys[-1], n_unit, 1)             # v_head
    params += [wa, ba, wv, bv]
    return params


# --------------------------------- reference ---------------------------------

def _dual_qnet_ref(x, params):
    n_hidden = (len(params) - 4) // 2
    h = x
    for i in range(n_hidden):
        h = jnp.tanh(h @ params[2 * i] + params[2 * i + 1])
    a = h @ params[-4] + params[-3]
    v = h @ params[-2] + params[-1]
    return v + a - jnp.mean(a, axis=1, keepdims=True)


if __name__ == "__main__":
    # Small, module-consistent shapes: discrete action space.
    batch = 8
    state_dim = 16        # np.prod(obs_shape)
    n_actions = 4         # action_space.n
    num_layer = 3
    hidden_dim = 32

    key = jax.random.PRNGKey(0)
    kx, kq1, kq2 = jax.random.split(key, 3)

    x = jax.random.normal(kx, (batch, state_dim), jnp.float32)
    q1_params = init_dual_qnet(kq1, state_dim, n_actions, num_layer, hidden_dim)
    q2_params = init_dual_qnet(kq2, state_dim, n_actions, num_layer, hidden_dim)

    q1_ref = _dual_qnet_ref(x, q1_params)
    q2_ref = _dual_qnet_ref(x, q2_params)

    # Primary path: dueling + both Q heads folded (2*hidden = 64 <= 256).
    packed = pack_double_qnet_params(q1_params, q2_params)
    q1, q2 = double_qnet_forward(x, packed, n_actions)
    jax.block_until_ready((q1, q2))
    assert q1.shape == (batch, n_actions) and q2.shape == (batch, n_actions)
    assert jnp.allclose(q1, q1_ref, atol=1e-5, rtol=1e-5)
    assert jnp.allclose(q2, q2_ref, atol=1e-5, rtol=1e-5)

    # Fallback path (wide hidden layers): per-head grid axis, same kernel.
    packed_wide = pack_double_qnet_params(q1_params, q2_params, fold_heads=False)
    q1b, q2b = double_qnet_forward(x, packed_wide, n_actions)
    jax.block_until_ready((q1b, q2b))
    assert jnp.allclose(q1b, q1_ref, atol=1e-5, rtol=1e-5)
    assert jnp.allclose(q2b, q2_ref, atol=1e-5, rtol=1e-5)

    print("KERNEL_OK")
</pallas_src>

<mosaic_0001>
module attributes {stable_mosaic.version = 11 : i64} {
  func.func @_double_qnet_kernel(%arg0: i32, %arg1: i32, %arg2: memref<8x16xf32, #tpu.memory_space<vmem>>, %arg3: memref<1x64x16xf32, #tpu.memory_space<vmem>>, %arg4: memref<1x64x64xf32, #tpu.memory_space<vmem>>, %arg5: memref<1x8x64xf32, #tpu.memory_space<vmem>>, %arg6: memref<1x64x1xf32, #tpu.memory_space<vmem>>, %arg7: memref<1x64x1xf32, #tpu.memory_space<vmem>>, %arg8: memref<1x8x1xf32, #tpu.memory_space<vmem>>, %arg9: memref<1x8x8xf32, #tpu.memory_space<vmem>>) attributes {dimension_semantics = [#tpu.dimension_semantics<parallel>, #tpu.dimension_semantics<parallel>], iteration_bounds = array<i64: 1, 1>, scalar_prefetch = 0 : i64, scratch_operands = 0 : i64, tpu.core_type = #tpu.core_type<tc>, window_params = [{transform_indices = @transform_0, window_bounds = array<i64: 8, 16>}, {transform_indices = @transform_1, window_bounds = array<i64: 1, 64, 16>}, {transform_indices = @transform_2, window_bounds = array<i64: 1, 64, 64>}, {transform_indices = @transform_3, window_bounds = array<i64: 1, 8, 64>}, {transform_indices = @transform_4, window_bounds = array<i64: 1, 64, 1>}, {transform_indices = @transform_5, window_bounds = array<i64: 1, 64, 1>}, {transform_indices = @transform_6, window_bounds = array<i64: 1, 8, 1>}, {transform_indices = @transform_7, window_bounds = array<i64: 1, 8, 8>}]} {
    %c0 = arith.constant 0 : index
    %c0_0 = arith.constant 0 : index
    %c0_1 = arith.constant 0 : index
    %0 = vector.load %arg3[%c0, %c0_0, %c0_1] : memref<1x64x16xf32, #tpu.memory_space<vmem>>, vector<1x64x16xf32>
    %1 = vector.shape_cast %0 : vector<1x64x16xf32> to vector<64x16xf32>
    %c0_2 = arith.constant 0 : index
    %c0_3 = arith.constant 0 : index
    %2 = vector.load %arg2[%c0_2, %c0_3] : memref<8x16xf32, #tpu.memory_space<vmem>>, vector<8x16xf32>
    %cst = arith.constant dense<0.000000e+00> : vector<64x8xf32>
    %3 = tpu.matmul %1, %2, %cst {dimension_numbers = #tpu.dot_dimension_numbers<[1], [1], [0], [0], [0, 0, 1, 0], [], []>} : vector<64x16xf32>, vector<8x16xf32>, vector<64x8xf32> -> vector<64x8xf32>
    %c0_4 = arith.constant 0 : index
    %c0_5 = arith.constant 0 : index
    %c0_6 = arith.constant 0 : index
    %4 = vector.load %arg6[%c0_4, %c0_5, %c0_6] : memref<1x64x1xf32, #tpu.memory_space<vmem>>, vector<1x64x1xf32>
    %5 = vector.shape_cast %4 : vector<1x64x1xf32> to vector<64x1xf32>
    %6 = vector.broadcast %5 : vector<64x1xf32> to vector<64x8xf32>
    %7 = arith.addf %3, %6 : vector<64x8xf32>
    %8 = math.tanh %7 : vector<64x8xf32>
    %c0_7 = arith.constant 0 : index
    %c0_8 = arith.constant 0 : index
    %c0_9 = arith.constant 0 : index
    %9 = vector.load %arg4[%c0_7, %c0_8, %c0_9] : memref<1x64x64xf32, #tpu.memory_space<vmem>>, vector<1x64x64xf32>
    %10 = vector.shape_cast %9 : vector<1x64x64xf32> to vector<64x64xf32>
    %cst_10 = arith.constant dense<0.000000e+00> : vector<64x8xf32>
    %11 = tpu.matmul %10, %8, %cst_10 {dimension_numbers = #tpu.dot_dimension_numbers<[1], [0], [0], [1], [0, 0, 1, 1], [], []>} : vector<64x64xf32>, vector<64x8xf32>, vector<64x8xf32> -> vector<64x8xf32>
    %c0_11 = arith.constant 0 : index
    %c0_12 = arith.constant 0 : index
    %c0_13 = arith.constant 0 : index
    %12 = vector.load %arg7[%c0_11, %c0_12, %c0_13] : memref<1x64x1xf32, #tpu.memory_space<vmem>>, vector<1x64x1xf32>
    %13 = vector.shape_cast %12 : vector<1x64x1xf32> to vector<64x1xf32>
    %14 = vector.broadcast %13 : vector<64x1xf32> to vector<64x8xf32>
    %15 = arith.addf %11, %14 : vector<64x8xf32>
    %16 = math.tanh %15 : vector<64x8xf32>
    %c0_14 = arith.constant 0 : index
    %c0_15 = arith.constant 0 : index
    %c0_16 = arith.constant 0 : index
    %17 = vector.load %arg5[%c0_14, %c0_15, %c0_16] : memref<1x8x64xf32, #tpu.memory_space<vmem>>, vector<1x8x64xf32>
    %18 = vector.shape_cast %17 : vector<1x8x64xf32> to vector<8x64xf32>
    %cst_17 = arith.constant dense<0.000000e+00> : vector<8x8xf32>
    %19 = tpu.matmul %18, %16, %cst_17 {dimension_numbers = #tpu.dot_dimension_numbers<[1], [0], [0], [1], [0, 0, 1, 1], [], []>} : vector<8x64xf32>, vector<64x8xf32>, vector<8x8xf32> -> vector<8x8xf32>
    %c0_18 = arith.constant 0 : index
    %c0_19 = arith.constant 0 : index
    %c0_20 = arith.constant 0 : index
    %20 = vector.load %arg8[%c0_18, %c0_19, %c0_20] : memref<1x8x1xf32, #tpu.memory_space<vmem>>, vector<1x8x1xf32>
    %21 = vector.shape_cast %20 : vector<1x8x1xf32> to vector<8x1xf32>
    %22 = vector.broadcast %21 : vector<8x1xf32> to vector<8x8xf32>
    %23 = arith.addf %19, %22 : vector<8x8xf32>
    %c0_21 = arith.constant 0 : index
    %c0_22 = arith.constant 0 : index
    %c0_23 = arith.constant 0 : index
    %24 = vector.load %arg9[%c0_21, %c0_22, %c0_23] : memref<1x8x8xf32, #tpu.memory_space<vmem>>, vector<1x8x8xf32>
    %25 = vector.shape_cast %24 : vector<1x8x8xf32> to vector<8x8xf32>
    %26 = vector.shape_cast %23 : vector<8x8xf32> to vector<1x8x8xf32>
    tpu.vector_store %arg9[%c0_21, %c0_22, %c0_23], %26 {strides = array<i32>} : memref<1x8x8xf32, #tpu.memory_space<vmem>>, vector<1x8x8xf32>,
    return
  }
  func.func @transform_0(%arg0: i32, %arg1: i32) -> (i32, i32) {
    %c0_i32 = arith.constant 0 : i32
    %c0_i32_0 = arith.constant 0 : i32
    return %arg1, %c0_i32 : i32, i32
  }
  func.func @transform_1(%arg0: i32, %arg1: i32) -> (i32, i32, i32) {
    %c0_i32 = arith.constant 0 : i32
    %c0_i32_0 = arith.constant 0 : i32
    %c0_i32_1 = arith.constant 0 : i32
    return %arg0, %c0_i32, %c0_i32_0 : i32, i32, i32
  }
  func.func @transform_2(%arg0: i32, %arg1: i32) -> (i32, i32, i32) {
    %c0_i32 = arith.constant 0 : i32
    %c0_i32_0 = arith.constant 0 : i32
    %c0_i32_1 = arith.constant 0 : i32
    return %arg0, %c0_i32, %c0_i32_0 : i32, i32, i32
  }
  func.func @transform_3(%arg0: i32, %arg1: i32) -> (i32, i32, i32) {
    %c0_i32 = arith.constant 0 : i32
    %c0_i32_0 = arith.constant 0 : i32
    %c0_i32_1 = arith.constant 0 : i32
    return %arg0, %c0_i32, %c0_i32_0 : i32, i32, i32
  }
  func.func @transform_4(%arg0: i32, %arg1: i32) -> (i32, i32, i32) {
    %c0_i32 = arith.constant 0 : i32
    %c0_i32_0 = arith.constant 0 : i32
    %c0_i32_1 = arith.constant 0 : i32
    return %arg0, %c0_i32, %c0_i32_0 : i32, i32, i32
  }
  func.func @transform_5(%arg0: i32, %arg1: i32) -> (i32, i32, i32) {
    %c0_i32 = arith.constant 0 : i32
    %c0_i32_0 = arith.constant 0 : i32
    %c0_i32_1 = arith.constant 0 : i32
    return %arg0, %c0_i32, %c0_i32_0 : i32, i32, i32
  }
  func.func @transform_6(%arg0: i32, %arg1: i32) -> (i32, i32, i32) {
    %c0_i32 = arith.constant 0 : i32
    %c0_i32_0 = arith.constant 0 : i32
    %c0_i32_1 = arith.constant 0 : i32
    return %arg0, %c0_i32, %c0_i32_0 : i32, i32, i32
  }
  func.func @transform_7(%arg0: i32, %arg1: i32) -> (i32, i32, i32) {
    %c0_i32 = arith.constant 0 : i32
    %c0_i32_0 = arith.constant 0 : i32
    return %arg0, %c0_i32, %arg1 : i32, i32, i32
  }
}

</mosaic_0001>

<llo_original>
// kernel: tpu_custom_call.1
$region0: #{tpu_custom_call.1}
  #allocation0 [shape = 'u32[]', space=smem, size = 0x4, offset = 0x4, fixed_abs, tag = 'smem constant byte address 0x4 - core index']
  #allocation1 [shape = 'u32[144,128]{1,0:T(1,128)}', space=vmem, size = 0x12000, scoped, tag = 'internal scratch']
  %s0 = inlined_call_operand.vmem [shape: f32[8,16], index: 0, kind: input, shape index: {}]
  %s1 = inlined_call_operand.vmem [shape: f32[1,64,16], index: 1, kind: input, shape index: {}]
  %s2 = inlined_call_operand.vmem [shape: f32[1,64,64], index: 2, kind: input, shape index: {}]
  %s3 = inlined_call_operand.vmem [shape: f32[1,8,64], index: 3, kind: input, shape index: {}]
  %s4 = inlined_call_operand.vmem [shape: f32[1,64,1], index: 4, kind: input, shape index: {}]
  %s5 = inlined_call_operand.vmem [shape: f32[1,64,1], index: 5, kind: input, shape index: {}]
  %s6 = inlined_call_operand.vmem [shape: f32[1,8,1], index: 6, kind: input, shape index: {}]
  %s7 = inlined_call_operand.hbm [shape: f32[1,8,8], index: 7, kind: output, shape index: {}]
  %s8 = sld [smem:[#allocation0]]
  $region38: #{tpu_custom_call.1} parent=0
    _
  %s10 = ssub.s32 1, %s8
  %s11 = scalar_select 0, %s10, %s8
  $region1: #{tpu_custom_call.1} parent=0
    #allocation2 [shape = 'u8[4096]{0}', space=vmem, size = 0x1000, scoped, tag = 'output window, operand 0, single buffered']
    #allocation3 [shape = 's32[1]{0}', space=sflag, size = 0x4, scoped, tag = 'scoped memory for tpu_custom_call.1']
    %12 = vsyncpa [#allocation3], 0
    // Predicated region
    $region2: #{tpu_custom_call.1} parent=1 // pred_check
      _
    $region3: #{tpu_custom_call.1} parent=1 // pred_check_branch
      %14 = sbr.rel (0) target = $region5
    $region4: #{tpu_custom_call.1} parent=1 // pred_region
      _
    $region5: #{tpu_custom_call.1} parent=1 // pred_fallthru
      _
    // Predicated region
    $region6: #{tpu_custom_call.1} parent=1 // pred_check
      _
    $region7: #{tpu_custom_call.1} parent=1 // pred_check_branch
      %16 = sbr.rel (0) target = $region9
    $region8: #{tpu_custom_call.1} parent=1 // pred_region
      _
    $region9: #{tpu_custom_call.1} parent=1 // pred_fallthru
      _
    // Predicated region
    $region10: #{tpu_custom_call.1} parent=1 // pred_check
      _
    $region11: #{tpu_custom_call.1} parent=1 // pred_check_branch
      %18 = sbr.rel (0) target = $region13
    $region12: #{tpu_custom_call.1} parent=1 // pred_region
      _
    $region13: #{tpu_custom_call.1} parent=1 // pred_fallthru
      _
    // Predicated region
    $region14: #{tpu_custom_call.1} parent=1 // pred_check
      _
    $region15: #{tpu_custom_call.1} parent=1 // pred_check_branch
      %20 = sbr.rel (0) target = $region17
    $region16: #{tpu_custom_call.1} parent=1 // pred_region
      _
    $region17: #{tpu_custom_call.1} parent=1 // pred_fallthru
      _
    // Predicated region
    $region18: #{tpu_custom_call.1} parent=1 // pred_check
      _
    $region19: #{tpu_custom_call.1} parent=1 // pred_check_branch
      %22 = sbr.rel (0) target = $region21
    $region20: #{tpu_custom_call.1} parent=1 // pred_region
      _
    $region21: #{tpu_custom_call.1} parent=1 // pred_fallthru
      _
    // Predicated region
    $region22: #{tpu_custom_call.1} parent=1 // pred_check
      _
    $region23: #{tpu_custom_call.1} parent=1 // pred_check_branch
      %24 = sbr.rel (0) target = $region25
    $region24: #{tpu_custom_call.1} parent=1 // pred_region
      _
    $region25: #{tpu_custom_call.1} parent=1 // pred_fallthru
      _
    // Predicated region
    $region26: #{tpu_custom_call.1} parent=1 // pred_check
      _
    $region27: #{tpu_custom_call.1} parent=1 // pred_check_branch
      %26 = sbr.rel (0) target = $region29
    $region28: #{tpu_custom_call.1} parent=1 // pred_region
      _
    $region29: #{tpu_custom_call.1} parent=1 // pred_fallthru
      _
    %v27 = vld [vmem:[%s1] sm:$0xff]
    %v28 = vld [vmem:[%s1 + $0x8] sm:$0xff]
    %v29 = vld [vmem:[%s1 + $0x10] sm:$0xff]
    %v30 = vld [vmem:[%s1 + $0x18] sm:$0xff]
    %v31 = vld [vmem:[%s1 + $0x20] sm:$0xff]
    %v32 = vld [vmem:[%s1 + $0x28] sm:$0xff]
    %v33 = vld [vmem:[%s1 + $0x30] sm:$0xff]
    %v34 = vld [vmem:[%s1 + $0x38] sm:$0xff]
    %v35 = vld [vmem:[%s0] sm:$0xff]
    %v36 = vld [vmem:[%s4] sm:$0xff]
    %v37 = vld [vmem:[%s4 + $0x8] sm:$0xff]
    %v38 = vld [vmem:[%s4 + $0x10] sm:$0xff]
    %v39 = vld [vmem:[%s4 + $0x18] sm:$0xff]
    %v40 = vld [vmem:[%s4 + $0x20] sm:$0xff]
    %v41 = vld [vmem:[%s4 + $0x28] sm:$0xff]
    %v42 = vld [vmem:[%s4 + $0x30] sm:$0xff]
    %v43 = vld [vmem:[%s4 + $0x38] sm:$0xff]
    %45 = vset.pattern.permute.xlu0 0
    %46 = vperm.xlu0 %45, %v36
    %v47 = vpop.permute.xlu0 %46
    %50 = vset.pattern.permute.xlu0 0
    %51 = vperm.xlu0 %50, %v37
    %v52 = vpop.permute.xlu0 %51
    %55 = vset.pattern.permute.xlu0 0
    %56 = vperm.xlu0 %55, %v38
    %v57 = vpop.permute.xlu0 %56
    %60 = vset.pattern.permute.xlu0 0
    %61 = vperm.xlu0 %60, %v39
    %v62 = vpop.permute.xlu0 %61
    %65 = vset.pattern.permute.xlu0 0
    %66 = vperm.xlu0 %65, %v40
    %v67 = vpop.permute.xlu0 %66
    %70 = vset.pattern.permute.xlu0 0
    %71 = vperm.xlu0 %70, %v41
    %v72 = vpop.permute.xlu0 %71
    %75 = vset.pattern.permute.xlu0 0
    %76 = vperm.xlu0 %75, %v42
    %v77 = vpop.permute.xlu0 %76
    %80 = vset.pattern.permute.xlu0 0
    %81 = vperm.xlu0 %80, %v43
    %v82 = vpop.permute.xlu0 %81
    %vm84 = vcmask 130048
    %v86 = vsel %vm84, %v27, 0
    %v89 = vsel %vm84, %v28, 0
    %v92 = vsel %vm84, %v29, 0
    %v95 = vsel %vm84, %v30, 0
    %v98 = vsel %vm84, %v31, 0
    %v101 = vsel %vm84, %v32, 0
    %v104 = vsel %vm84, %v33, 0
    %v107 = vsel %vm84, %v34, 0
    %v110 = vsel %vm84, %v35, 0
    %112 = vmatprep.subr.mxu0 0.0
    %113 = vmatpush1.xpose.msra.mxu0 %v110
    %114 = vmatprep.subr.mxu0 0.0
    %115 = vmatpush1.xpose.msra.mxu0 0.0
    %116 = vmatprep.subr.mxu0 0.0
    %117 = vmatpush1.xpose.msra.mxu0 0.0
    %118 = vmatprep.subr.mxu0 0.0
    %119 = vmatpush1.xpose.msra.mxu0 0.0
    %120 = vmatprep.subr.mxu0 0.0
    %121 = vmatpush1.xpose.msra.mxu0 0.0
    %122 = vmatprep.subr.mxu0 0.0
    %123 = vmatpush1.xpose.msra.mxu0 0.0
    %124 = vmatprep.subr.mxu0 0.0
    %125 = vmatpush1.xpose.msra.mxu0 0.0
    %126 = vmatprep.subr.mxu0 0.0
    %127 = vmatpush1.xpose.msra.mxu0 0.0
    %128 = vmatprep.subr.mxu0 0.0
    %129 = vmatpush1.xpose.msra.mxu0 0.0
    %130 = vmatprep.subr.mxu0 0.0
    %131 = vmatpush1.xpose.msra.mxu0 0.0
    %132 = vmatprep.subr.mxu0 0.0
    %133 = vmatpush1.xpose.msra.mxu0 0.0
    %134 = vmatprep.subr.mxu0 0.0
    %135 = vmatpush1.xpose.msra.mxu0 0.0
    %136 = vmatprep.subr.mxu0 0.0
    %137 = vmatpush1.xpose.msra.mxu0 0.0
    %138 = vmatprep.subr.mxu0 0.0
    %139 = vmatpush1.xpose.msra.mxu0 0.0
    %140 = vmatprep.subr.mxu0 0.0
    %141 = vmatpush1.xpose.msra.mxu0 0.0
    %142 = vmatprep.subr.mxu0 0.0
    %143 = vmatpush1.xpose.msra.mxu0 0.0
    %144 = vmatprep.subr.mxu0 0.0
    %145 = vmatpush1.xpose.msra.mxu0 0.0
    %146 = vmatprep.subr.mxu0 0.0
    %147 = vmatpush1.xpose.msra.mxu0 0.0
    %148 = vmatprep.subr.mxu0 0.0
    %149 = vmatpush1.xpose.msra.mxu0 0.0
    %150 = vmatprep.subr.mxu0 0.0
    %151 = vmatpush1.xpose.msra.mxu0 0.0
    %152 = vmatprep.subr.mxu0 0.0
    %153 = vmatpush1.xpose.msra.mxu0 0.0
    %154 = vmatprep.subr.mxu0 0.0
    %155 = vmatpush1.xpose.msra.mxu0 0.0
    %156 = vmatprep.subr.mxu0 0.0
    %157 = vmatpush1.xpose.msra.mxu0 0.0
    %158 = vmatprep.subr.mxu0 0.0
    %159 = vmatpush1.xpose.msra.mxu0 0.0
    %160 = vmatprep.subr.mxu0 0.0
    %161 = vmatpush1.xpose.msra.mxu0 0.0
    %162 = vmatprep.subr.mxu0 0.0
    %163 = vmatpush1.xpose.msra.mxu0 0.0
    %164 = vmatprep.subr.mxu0 0.0
    %165 = vmatpush1.xpose.msra.mxu0 0.0
    %166 = vmatprep.subr.mxu0 0.0
    %167 = vmatpush1.xpose.msra.mxu0 0.0
    %168 = vmatprep.subr.mxu0 0.0
    %169 = vmatpush1.xpose.msra.mxu0 0.0
    %170 = vmatprep.subr.mxu0 0.0
    %171 = vmatpush1.xpose.msra.mxu0 0.0
    %172 = vmatprep.subr.mxu0 0.0
    %173 = vmatpush1.xpose.msra.mxu0 0.0
    %174 = vmatprep.subr.mxu0 0.0
    %175 = vmatpush1.xpose.msra.mxu0 0.0
    %176 = vmatprep.mubr.f32.mxu0 0.0
    %177 = vmatmul.mubr.f32.gmra.mrb[0].mxu0 %v86
    %v178 = vpop.f32.mrb[0].mxu0
    %v179 = vadd.f32 %v47, %v178
    %v180 = vpop.f32.mrb[0].mxu0
    %181 = vmatprep.mubr.f32.mxu0 0.0
    %182 = vmatmul.mubr.f32.gmra.mrb[0].mxu0 %v89
    %v183 = vpop.f32.mrb[0].mxu0
    %v184 = vadd.f32 %v52, %v183
    %v185 = vpop.f32.mrb[0].mxu0
    %186 = vmatprep.mubr.f32.mxu0 0.0
    %187 = vmatmul.mubr.f32.gmra.mrb[0].mxu0 %v92
    %v188 = vpop.f32.mrb[0].mxu0
    %v189 = vadd.f32 %v57, %v188
    %v190 = vpop.f32.mrb[0].mxu0
    %191 = vmatprep.mubr.f32.mxu0 0.0
    %192 = vmatmul.mubr.f32.gmra.mrb[0].mxu0 %v95
    %v193 = vpop.f32.mrb[0].mxu0
    %v194 = vadd.f32 %v62, %v193
    %v195 = vpop.f32.mrb[0].mxu0
    %196 = vmatprep.mubr.f32.mxu0 0.0
    %197 = vmatmul.mubr.f32.gmra.mrb[0].mxu0 %v98
    %v198 = vpop.f32.mrb[0].mxu0
    %v199 = vadd.f32 %v67, %v198
    %v200 = vpop.f32.mrb[0].mxu0
    %201 = vmatprep.mubr.f32.mxu0 0.0
    %202 = vmatmul.mubr.f32.gmra.mrb[0].mxu0 %v101
    %v203 = vpop.f32.mrb[0].mxu0
    %v204 = vadd.f32 %v72, %v203
    %v205 = vpop.f32.mrb[0].mxu0
    %206 = vmatprep.mubr.f32.mxu0 0.0
    %207 = vmatmul.mubr.f32.gmra.mrb[0].mxu0 %v104
    %v208 = vpop.f32.mrb[0].mxu0
    %v209 = vadd.f32 %v77, %v208
    %v210 = vpop.f32.mrb[0].mxu0
    %211 = vmatprep.mubr.f32.mxu0 0.0
    %212 = vmatmul.mubr.f32.gmra.mrb[0].mxu0 %v107
    %v213 = vpop.f32.mrb[0].mxu0
    %v214 = vadd.f32 %v82, %v213
    %v215 = vpop.f32.mrb[0].mxu0
    %216 = vdwg.mxu0
    %v217 = vtanh.pop %v179
    %v218 = vtanh.pop %v184
    %v219 = vtanh.pop %v189
    %v220 = vtanh.pop %v194
    %v221 = vtanh.pop %v199
    %v222 = vtanh.pop %v204
    %v223 = vtanh.pop %v209
    %v224 = vtanh.pop %v214
    %v225 = vld [vmem:[%s2] sm:$0xff]
    %v226 = vld [vmem:[%s2 + $0x8] sm:$0xff]
    %v227 = vld [vmem:[%s2 + $0x10] sm:$0xff]
    %v228 = vld [vmem:[%s2 + $0x18] sm:$0xff]
    %v229 = vld [vmem:[%s2 + $0x20] sm:$0xff]
    %v230 = vld [vmem:[%s2 + $0x28] sm:$0xff]
    %v231 = vld [vmem:[%s2 + $0x30] sm:$0xff]
    %v232 = vld [vmem:[%s2 + $0x38] sm:$0xff]
    %v233 = vld [vmem:[%s5] sm:$0xff]
    %v234 = vld [vmem:[%s5 + $0x8] sm:$0xff]
    %v235 = vld [vmem:[%s5 + $0x10] sm:$0xff]
    %v236 = vld [vmem:[%s5 + $0x18] sm:$0xff]
    %v237 = vld [vmem:[%s5 + $0x20] sm:$0xff]
    %v238 = vld [vmem:[%s5 + $0x28] sm:$0xff]
    %v239 = vld [vmem:[%s5 + $0x30] sm:$0xff]
    %v240 = vld [vmem:[%s5 + $0x38] sm:$0xff]
    %242 = vset.pattern.permute.xlu0 0
    %243 = vperm.xlu0 %242, %v233
    %v244 = vpop.permute.xlu0 %243
    %247 = vset.pattern.permute.xlu0 0
    %248 = vperm.xlu0 %247, %v234
    %v249 = vpop.permute.xlu0 %248
    %252 = vset.pattern.permute.xlu0 0
    %253 = vperm.xlu0 %252, %v235
    %v254 = vpop.permute.xlu0 %253
    %257 = vset.pattern.permute.xlu0 0
    %258 = vperm.xlu0 %257, %v236
    %v259 = vpop.permute.xlu0 %258
    %262 = vset.pattern.permute.xlu0 0
    %263 = vperm.xlu0 %262, %v237
    %v264 = vpop.permute.xlu0 %263
    %267 = vset.pattern.permute.xlu0 0
    %268 = vperm.xlu0 %267, %v238
    %v269 = vpop.permute.xlu0 %268
    %272 = vset.pattern.permute.xlu0 0
    %273 = vperm.xlu0 %272, %v239
    %v274 = vpop.permute.xlu0 %273
    %277 = vset.pattern.permute.xlu0 0
    %278 = vperm.xlu0 %277, %v240
    %v279 = vpop.permute.xlu0 %278
    %vm281 = vcmask 523264
    %v283 = vsel %vm281, %v225, 0
    %v286 = vsel %vm281, %v226, 0
    %v289 = vsel %vm281, %v227, 0
    %v292 = vsel %vm281, %v228, 0
    %v295 = vsel %vm281, %v229, 0
    %v298 = vsel %vm281, %v230, 0
    %v301 = vsel %vm281, %v231, 0
    %v304 = vsel %vm281, %v232, 0
    %306 = vmatprep.subr.mxu0 0.0
    %307 = vmatpush1.msra.mxu0 %v217
    %308 = vmatprep.subr.mxu0 0.0
    %309 = vmatpush1.msra.mxu0 %v218
    %310 = vmatprep.subr.mxu0 0.0
    %311 = vmatpush1.msra.mxu0 %v219
    %312 = vmatprep.subr.mxu0 0.0
    %313 = vmatpush1.msra.mxu0 %v220
    %314 = vmatprep.subr.mxu0 0.0
    %315 = vmatpush1.msra.mxu0 %v221
    %316 = vmatprep.subr.mxu0 0.0
    %317 = vmatpush1.msra.mxu0 %v222
    %318 = vmatprep.subr.mxu0 0.0
    %319 = vmatpush1.msra.mxu0 %v223
    %320 = vmatprep.subr.mxu0 0.0
    %321 = vmatpush1.msra.mxu0 %v224
    %322 = vmatprep.subr.mxu0 0.0
    %323 = vmatpush1.msra.mxu0 0.0
    %324 = vmatprep.subr.mxu0 0.0
    %325 = vmatpush1.msra.mxu0 0.0
    %326 = vmatprep.subr.mxu0 0.0
    %327 = vmatpush1.msra.mxu0 0.0
    %328 = vmatprep.subr.mxu0 0.0
    %329 = vmatpush1.msra.mxu0 0.0
    %330 = vmatprep.subr.mxu0 0.0
    %331 = vmatpush1.msra.mxu0 0.0
    %332 = vmatprep.subr.mxu0 0.0
    %333 = vmatpush1.msra.mxu0 0.0
    %334 = vmatprep.subr.mxu0 0.0
    %335 = vmatpush1.msra.mxu0 0.0
    %336 = vmatprep.subr.mxu0 0.0
    %337 = vmatpush1.msra.mxu0 0.0
    %338 = vmatprep.subr.mxu0 0.0
    %339 = vmatpush1.msra.mxu0 0.0
    %340 = vmatprep.subr.mxu0 0.0
    %341 = vmatpush1.msra.mxu0 0.0
    %342 = vmatprep.subr.mxu0 0.0
    %343 = vmatpush1.msra.mxu0 0.0
    %344 = vmatprep.subr.mxu0 0.0
    %345 = vmatpush1.msra.mxu0 0.0
    %346 = vmatprep.subr.mxu0 0.0
    %347 = vmatpush1.msra.mxu0 0.0
    %348 = vmatprep.subr.mxu0 0.0
    %349 = vmatpush1.msra.mxu0 0.0
    %350 = vmatprep.subr.mxu0 0.0
    %351 = vmatpush1.msra.mxu0 0.0
    %352 = vmatprep.subr.mxu0 0.0
    %353 = vmatpush1.msra.mxu0 0.0
    %354 = vmatprep.subr.mxu0 0.0
    %355 = vmatpush1.msra.mxu0 0.0
    %356 = vmatprep.subr.mxu0 0.0
    %357 = vmatpush1.msra.mxu0 0.0
    %358 = vmatprep.subr.mxu0 0.0
    %359 = vmatpush1.msra.mxu0 0.0
    %360 = vmatprep.subr.mxu0 0.0
    %361 = vmatpush1.msra.mxu0 0.0
    %362 = vmatprep.subr.mxu0 0.0
    %363 = vmatpush1.msra.mxu0 0.0
    %364 = vmatprep.subr.mxu0 0.0
    %365 = vmatpush1.msra.mxu0 0.0
    %366 = vmatprep.subr.mxu0 0.0
    %367 = vmatpush1.msra.mxu0 0.0
    %368 = vmatprep.subr.mxu0 0.0
    %369 = vmatpush1.msra.mxu0 0.0
    %370 = vmatprep.mubr.f32.mxu0 0.0
    %371 = vmatmul.mubr.f32.gmra.mrb[0].mxu0 %v283
    %v372 = vpop.f32.mrb[0].mxu0
    %v373 = vadd.f32 %v244, %v372
    %v374 = vpop.f32.mrb[0].mxu0
    %375 = vmatprep.mubr.f32.mxu0 0.0
    %376 = vmatmul.mubr.f32.gmra.mrb[0].mxu0 %v286
    %v377 = vpop.f32.mrb[0].mxu0
    %v378 = vadd.f32 %v249, %v377
    %v379 = vpop.f32.mrb[0].mxu0
    %380 = vmatprep.mubr.f32.mxu0 0.0
    %381 = vmatmul.mubr.f32.gmra.mrb[0].mxu0 %v289
    %v382 = vpop.f32.mrb[0].mxu0
    %v383 = vadd.f32 %v254, %v382
    %v384 = vpop.f32.mrb[0].mxu0
    %385 = vmatprep.mubr.f32.mxu0 0.0
    %386 = vmatmul.mubr.f32.gmra.mrb[0].mxu0 %v292
    %v387 = vpop.f32.mrb[0].mxu0
    %v388 = vadd.f32 %v259, %v387
    %v389 = vpop.f32.mrb[0].mxu0
    %390 = vmatprep.mubr.f32.mxu0 0.0
    %391 = vmatmul.mubr.f32.gmra.mrb[0].mxu0 %v295
    %v392 = vpop.f32.mrb[0].mxu0
    %v393 = vadd.f32 %v264, %v392
    %v394 = vpop.f32.mrb[0].mxu0
    %395 = vmatprep.mubr.f32.mxu0 0.0
    %396 = vmatmul.mubr.f32.gmra.mrb[0].mxu0 %v298
    %v397 = vpop.f32.mrb[0].mxu0
    %v398 = vadd.f32 %v269, %v397
    %v399 = vpop.f32.mrb[0].mxu0
    %400 = vmatprep.mubr.f32.mxu0 0.0
    %401 = vmatmul.mubr.f32.gmra.mrb[0].mxu0 %v301
    %v402 = vpop.f32.mrb[0].mxu0
    %v403 = vadd.f32 %v274, %v402
    %v404 = vpop.f32.mrb[0].mxu0
    %405 = vmatprep.mubr.f32.mxu0 0.0
    %406 = vmatmul.mubr.f32.gmra.mrb[0].mxu0 %v304
    %v407 = vpop.f32.mrb[0].mxu0
    %v408 = vadd.f32 %v279, %v407
    %v409 = vpop.f32.mrb[0].mxu0
    %410 = vdwg.mxu0
    %v411 = vtanh.pop %v373
    %v412 = vtanh.pop %v378
    %v413 = vtanh.pop %v383
    %v414 = vtanh.pop %v388
    %v415 = vtanh.pop %v393
    %v416 = vtanh.pop %v398
    %v417 = vtanh.pop %v403
    %v418 = vtanh.pop %v408
    %v419 = vld [vmem:[%s3] sm:$0xff]
    %v420 = vld [vmem:[%s6] sm:$0xff]
    %422 = vset.pattern.permute.xlu0 0
    %423 = vperm.xlu0 %422, %v420
    %v424 = vpop.permute.xlu0 %423
    %v427 = vsel %vm281, %v419, 0
    %429 = vmatprep.subr.mxu0 0.0
    %430 = vmatpush1.msra.mxu0 %v411
    %431 = vmatprep.subr.mxu0 0.0
    %432 = vmatpush1.msra.mxu0 %v412
    %433 = vmatprep.subr.mxu0 0.0
    %434 = vmatpush1.msra.mxu0 %v413
    %435 = vmatprep.subr.mxu0 0.0
    %436 = vmatpush1.msra.mxu0 %v414
    %437 = vmatprep.subr.mxu0 0.0
    %438 = vmatpush1.msra.mxu0 %v415
    %439 = vmatprep.subr.mxu0 0.0
    %440 = vmatpush1.msra.mxu0 %v416
    %441 = vmatprep.subr.mxu0 0.0
    %442 = vmatpush1.msra.mxu0 %v417
    %443 = vmatprep.subr.mxu0 0.0
    %444 = vmatpush1.msra.mxu0 %v418
    %445 = vmatprep.subr.mxu0 0.0
    %446 = vmatpush1.msra.mxu0 0.0
    %447 = vmatprep.subr.mxu0 0.0
    %448 = vmatpush1.msra.mxu0 0.0
    %449 = vmatprep.subr.mxu0 0.0
    %450 = vmatpush1.msra.mxu0 0.0
    %451 = vmatprep.subr.mxu0 0.0
    %452 = vmatpush1.msra.mxu0 0.0
    %453 = vmatprep.subr.mxu0 0.0
    %454 = vmatpush1.msra.mxu0 0.0
    %455 = vmatprep.subr.mxu0 0.0
    %456 = vmatpush1.msra.mxu0 0.0
    %457 = vmatprep.subr.mxu0 0.0
    %458 = vmatpush1.msra.mxu0 0.0
    %459 = vmatprep.subr.mxu0 0.0
    %460 = vmatpush1.msra.mxu0 0.0
    %461 = vmatprep.subr.mxu0 0.0
    %462 = vmatpush1.msra.mxu0 0.0
    %463 = vmatprep.subr.mxu0 0.0
    %464 = vmatpush1.msra.mxu0 0.0
    %465 = vmatprep.subr.mxu0 0.0
    %466 = vmatpush1.msra.mxu0 0.0
    %467 = vmatprep.subr.mxu0 0.0
    %468 = vmatpush1.msra.mxu0 0.0
    %469 = vmatprep.subr.mxu0 0.0
    %470 = vmatpush1.msra.mxu0 0.0
    %471 = vmatprep.subr.mxu0 0.0
    %472 = vmatpush1.msra.mxu0 0.0
    %473 = vmatprep.subr.mxu0 0.0
    %474 = vmatpush1.msra.mxu0 0.0
    %475 = vmatprep.subr.mxu0 0.0
    %476 = vmatpush1.msra.mxu0 0.0
    %477 = vmatprep.subr.mxu0 0.0
    %478 = vmatpush1.msra.mxu0 0.0
    %479 = vmatprep.subr.mxu0 0.0
    %480 = vmatpush1.msra.mxu0 0.0
    %481 = vmatprep.subr.mxu0 0.0
    %482 = vmatpush1.msra.mxu0 0.0
    %483 = vmatprep.subr.mxu0 0.0
    %484 = vmatpush1.msra.mxu0 0.0
    %485 = vmatprep.subr.mxu0 0.0
    %486 = vmatpush1.msra.mxu0 0.0
    %487 = vmatprep.subr.mxu0 0.0
    %488 = vmatpush1.msra.mxu0 0.0
    %489 = vmatprep.subr.mxu0 0.0
    %490 = vmatpush1.msra.mxu0 0.0
    %491 = vmatprep.subr.mxu0 0.0
    %492 = vmatpush1.msra.mxu0 0.0
    %493 = vmatprep.mubr.f32.mxu0 0.0
    %494 = vmatmul.mubr.f32.gmra.mrb[0].mxu0 %v427
    %v495 = vpop.f32.mrb[0].mxu0
    %v496 = vadd.f32 %v424, %v495
    %v497 = vpop.f32.mrb[0].mxu0
    %498 = vdwg.mxu0
    %vm499 = vcmask 64512
    %500 = vst.msk [vmem:[#allocation2] sm:$0xff] %vm499, %v496
    // Predicated region
    $region30: #{tpu_custom_call.1} parent=1 // pred_check
      _
    $region31: #{tpu_custom_call.1} parent=1 // pred_check_branch
      %502 = sbr.rel (0) target = $region33
    $region32: #{tpu_custom_call.1} parent=1 // pred_region
      %s504 = ssub.s32 128, 128
      %505 = vsyncadd [#allocation3], %s504
      %s507 = sshll.u32 [#allocation2], 4
      %s508 = int_to_ptr.vmem [resolvable:$true] %s507
      %510 = dma.vmem_to_hbm [thread:$0]  %s508, 128, %s7, [#allocation3]
    $region33: #{tpu_custom_call.1} parent=1 // pred_fallthru
      _
    // Predicated region
    $region34: #{tpu_custom_call.1} parent=1 // pred_check
      _
    $region35: #{tpu_custom_call.1} parent=1 // pred_check_branch
      %512 = sbr.rel (0) target = $region37
    $region36: #{tpu_custom_call.1} parent=1 // pred_region
      %513 = dma.done [#allocation3], 128
    $region37: #{tpu_custom_call.1} parent=1 // pred_fallthru
      _
    %514 = vsyncpa [#allocation3], 1

</llo_original>
